<compile_context>
chip_gen: v6e
topology: v6e:2x2x1
jax: 0.10.0
libtpu: 0.0.40
codegen_flags: <defaults>
</compile_context>

<pallas_src>
import functools

import jax
import jax.numpy as jnp
from jax.experimental import pallas as pl
from jax.experimental.pallas import tpu as pltpu

LANE = 128  # TPU lane width; non-full last block dims must be multiples of this.


def _round_up(x, m):
    return (x + m - 1) // m * m


def _sublane_multiple(dtype):
    # f32 -> 8 sublanes, bf16 -> 16, int8/fp8 -> 32 (packed VMEM layouts).
    return max(8, 32 // max(jnp.dtype(dtype).itemsize, 1))


def _tpu_vmem_capacity_bytes():
    try:
        return int(pltpu.get_tpu_info().vmem_capacity_bytes)
    except Exception:
        return 64 << 20  # conservative fallback = v7x per-TensorCore VMEM


def _ln_kernel(x_ref, alpha_ref, beta_ref, o_ref, *, epsilon, inv_c):
    # x_ref: (TB, C, TL). Normalization is over channels (axis=1), independent
    # per (b, l) lane column. Two-pass stats in f32 match PyTorch's
    # mean / ((x - mean) ** 2).mean() formulation.
    x = x_ref[...].astype(jnp.float32)
    mean = jnp.sum(x, axis=1, keepdims=True) * inv_c
    xc = x - mean
    var = jnp.sum(xc * xc, axis=1, keepdims=True) * inv_c
    inv_std = jax.lax.rsqrt(var + epsilon)
    y = xc * inv_std
    y = y * alpha_ref[...].astype(jnp.float32) + beta_ref[...].astype(jnp.float32)
    o_ref[...] = y.astype(o_ref.dtype)


def layer_norm_channels(x, alpha, beta, epsilon=1e-5):
    """x: [B, C, L], alpha/beta: [1, C, 1] (per-channel). Returns [B, C, L]."""
    B, C, L = x.shape
    itemsize = jnp.dtype(x.dtype).itemsize
    cp = _round_up(C, _sublane_multiple(x.dtype))   # sublane-padded channels
    l128 = _round_up(L, LANE)                       # lane-padded length (VMEM layout)

    cap = _tpu_vmem_capacity_bytes()
    # Pipeline footprint budget for 2x input + 2x output double-buffers; keep it
    # well under half of physical VMEM on every generation.
    budget = max(16 << 20, min(28 << 20, cap // 2 - (4 << 20)))
    per_buf = budget // 4

    # Actual VMEM bytes of one full-(C, L) block for a single batch element.
    row_bytes = cp * l128 * itemsize

    kernel = functools.partial(_ln_kernel, epsilon=float(epsilon), inv_c=1.0 / C)
    cost = pl.CostEstimate(
        flops=7 * B * C * L,
        transcendentals=B * L,                       # one rsqrt per (b, l) column
        bytes_accessed=2 * B * C * L * itemsize + 2 * C * itemsize,
    )

    if row_bytes <= per_buf and (B > 1 or l128 <= LANE):
        # --- Batch-blocked path: contiguous HBM DMA, no padding anywhere. ---
        tb = max(1, per_buf // row_bytes)
        if tb >= B and B > 1:
            tb = (B + 1) // 2        # keep >= 2 grid steps (both v7x TCs busy)
        tb = min(tb, B)
        grid = (pl.cdiv(B, tb),)
        footprint = 4 * tb * row_bytes + 4 * cp * itemsize
        in_specs = [
            pl.BlockSpec((tb, C, L), lambda b: (b, 0, 0)),
            pl.BlockSpec((1, C, 1), lambda b: (0, 0, 0)),
            pl.BlockSpec((1, C, 1), lambda b: (0, 0, 0)),
        ]
        out_specs = pl.BlockSpec((tb, C, L), lambda b: (b, 0, 0))
        dims = ("parallel",)
    else:
        # --- L-tiled path: lane-dense (1, C, TL) blocks. ---
        # TL targets a few MiB per buffer; L is split evenly across tiles and
        # any ragged tail is handled by Pallas boundary masking (no jnp.pad).
        tl_max = max(LANE, (per_buf // (cp * itemsize)) // LANE * LANE)
        n = pl.cdiv(l128, tl_max)
        if B == 1:
            n = max(n, 2)            # both v7x TensorCores get work
        tl = _round_up(pl.cdiv(l128, n), LANE)
        grid = (B, pl.cdiv(L, tl))
        footprint = 4 * cp * tl * itemsize + 4 * cp * itemsize
        in_specs = [
            pl.BlockSpec((1, C, tl), lambda b, l: (b, 0, l)),
            pl.BlockSpec((1, C, 1), lambda b, l: (0, 0, 0)),
            pl.BlockSpec((1, C, 1), lambda b, l: (0, 0, 0)),
        ]
        out_specs = pl.BlockSpec((1, C, tl), lambda b, l: (b, 0, l))
        dims = ("parallel", "parallel")
        # TODO(synk): if a huge C pins TL at the 128-lane floor, pl.Buffered(3)
        # on the x input spec can hide DMA issue latency (~5-15%).

    vmem_limit = int(max(8 << 20, min(footprint + (2 << 20),
                                      max(cap - (16 << 20), 32 << 20))))

    return pl.pallas_call(
        kernel,
        out_shape=jax.ShapeDtypeStruct((B, C, L), x.dtype),
        grid_spec=pltpu.PrefetchScalarGridSpec(
            num_scalar_prefetch=0,
            grid=grid,
            in_specs=in_specs,
            out_specs=out_specs,
        ),
        compiler_params=pltpu.CompilerParams(
            dimension_semantics=dims,
            vmem_limit_bytes=vmem_limit,
        ),
        cost_estimate=cost,
    )(x, alpha, beta)


def reference_ln(x, alpha, beta, epsilon=1e-5):
    mean = jnp.mean(x, axis=1, keepdims=True)
    var = jnp.mean((x - mean) ** 2, axis=1, keepdims=True)
    std = jnp.sqrt(var + epsilon)
    return (x - mean) / std * alpha + beta


if __name__ == "__main__":
    key = jax.random.PRNGKey(0)

    # Shapes consistent with the module's [B, dim, L] input.
    B, C, L = 2, 4, 16
    x = jax.random.normal(key, (B, C, L), dtype=jnp.float32)
    # Deterministic parameter init matching __init__: alpha = ones, beta = zeros.
    alpha = jnp.ones((1, C, 1), dtype=jnp.float32)
    beta = jnp.zeros((1, C, 1), dtype=jnp.float32)

    out = jax.block_until_ready(layer_norm_channels(x, alpha, beta, epsilon=1e-5))
    ref = reference_ln(x, alpha, beta, epsilon=1e-5)
    assert out.shape == ref.shape
    assert jnp.allclose(out, ref, atol=1e-5, rtol=1e-5), "mismatch (batch path)"

    # Lane-dense shape with non-trivial alpha/beta (batch-blocked path, B > 1).
    x2 = jax.random.normal(jax.random.PRNGKey(1), (2, 8, 384), dtype=jnp.float32)
    a2 = jnp.linspace(0.5, 1.5, 8, dtype=jnp.float32).reshape(1, 8, 1)
    b2 = jnp.linspace(-0.1, 0.1, 8, dtype=jnp.float32).reshape(1, 8, 1)
    out2 = jax.block_until_ready(layer_norm_channels(x2, a2, b2))
    assert jnp.allclose(out2, reference_ln(x2, a2, b2), atol=1e-5, rtol=1e-5), \
        "mismatch (lane-dense)"

    # L-tiled path with a ragged tail (no jnp.pad; Pallas boundary masking).
    x3 = jax.random.normal(jax.random.PRNGKey(2), (1, 8, 400), dtype=jnp.float32)
    a3 = jnp.ones((1, 8, 1), dtype=jnp.float32)
    b3 = jnp.zeros((1, 8, 1), dtype=jnp.float32)
    out3 = jax.block_until_ready(layer_norm_channels(x3, a3, b3))
    assert jnp.allclose(out3, reference_ln(x3, a3, b3), atol=1e-5, rtol=1e-5), \
        "mismatch (L-tiled ragged)"

    print("KERNEL_OK")
</pallas_src>

<mosaic_0001>
module attributes {stable_mosaic.version = 11 : i64} {
  func.func @_ln_kernel(%arg0: i32, %arg1: memref<1x4x16xf32, #tpu.memory_space<vmem>>, %arg2: memref<1x4x1xf32, #tpu.memory_space<vmem>>, %arg3: memref<1x4x1xf32, #tpu.memory_space<vmem>>, %arg4: memref<1x4x16xf32, #tpu.memory_space<vmem>>) attributes {dimension_semantics = [#tpu.dimension_semantics<parallel>], iteration_bounds = array<i64: 2>, scalar_prefetch = 0 : i64, scratch_operands = 0 : i64, tpu.core_type = #tpu.core_type<tc>, window_params = [{transform_indices = @transform_0, window_bounds = array<i64: 1, 4, 16>}, {pipeline_mode = #tpu.pipeline_mode<synchronous>, transform_indices = @transform_1, window_bounds = array<i64: 1, 4, 1>}, {pipeline_mode = #tpu.pipeline_mode<synchronous>, transform_indices = @transform_2, window_bounds = array<i64: 1, 4, 1>}, {transform_indices = @transform_3, window_bounds = array<i64: 1, 4, 16>}]} {
    %c0 = arith.constant 0 : index
    %c0_0 = arith.constant 0 : index
    %c0_1 = arith.constant 0 : index
    %0 = vector.load %arg1[%c0, %c0_0, %c0_1] : memref<1x4x16xf32, #tpu.memory_space<vmem>>, vector<1x4x16xf32>
    %cst = arith.constant dense<0.000000e+00> : vector<1x16xf32>
    %1 = vector.multi_reduction <add>, %0, %cst [1] : vector<1x4x16xf32> to vector<1x16xf32>
    %2 = vector.shape_cast %1 : vector<1x16xf32> to vector<1x1x16xf32>
    %cst_2 = arith.constant 2.500000e-01 : f32
    %3 = vector.broadcast %cst_2 : f32 to vector<1x1x16xf32>
    %4 = arith.mulf %2, %3 : vector<1x1x16xf32>
    %5 = vector.broadcast %4 : vector<1x1x16xf32> to vector<1x4x16xf32>
    %6 = arith.subf %0, %5 : vector<1x4x16xf32>
    %7 = arith.mulf %6, %6 : vector<1x4x16xf32>
    %cst_3 = arith.constant dense<0.000000e+00> : vector<1x16xf32>
    %8 = vector.multi_reduction <add>, %7, %cst_3 [1] : vector<1x4x16xf32> to vector<1x16xf32>
    %9 = vector.shape_cast %8 : vector<1x16xf32> to vector<1x1x16xf32>
    %cst_4 = arith.constant 2.500000e-01 : f32
    %10 = vector.broadcast %cst_4 : f32 to vector<1x1x16xf32>
    %11 = arith.mulf %9, %10 : vector<1x1x16xf32>
    %cst_5 = arith.constant 9.99999974E-6 : f32
    %12 = vector.broadcast %cst_5 : f32 to vector<1x1x16xf32>
    %13 = arith.addf %11, %12 : vector<1x1x16xf32>
    %14 = math.rsqrt %13 : vector<1x1x16xf32>
    %15 = vector.broadcast %14 : vector<1x1x16xf32> to vector<1x4x16xf32>
    %16 = arith.mulf %6, %15 : vector<1x4x16xf32>
    %c0_6 = arith.constant 0 : index
    %c0_7 = arith.constant 0 : index
    %c0_8 = arith.constant 0 : index
    %17 = vector.load %arg2[%c0_6, %c0_7, %c0_8] : memref<1x4x1xf32, #tpu.memory_space<vmem>>, vector<1x4x1xf32>
    %18 = vector.broadcast %17 : vector<1x4x1xf32> to vector<1x4x16xf32>
    %19 = arith.mulf %16, %18 : vector<1x4x16xf32>
    %c0_9 = arith.constant 0 : index
    %c0_10 = arith.constant 0 : index
    %c0_11 = arith.constant 0 : index
    %20 = vector.load %arg3[%c0_9, %c0_10, %c0_11] : memref<1x4x1xf32, #tpu.memory_space<vmem>>, vector<1x4x1xf32>
    %21 = vector.broadcast %20 : vector<1x4x1xf32> to vector<1x4x16xf32>
    %22 = arith.addf %19, %21 : vector<1x4x16xf32>
    %c0_12 = arith.constant 0 : index
    %c0_13 = arith.constant 0 : index
    %c0_14 = arith.constant 0 : index
    %23 = vector.load %arg4[%c0_12, %c0_13, %c0_14] : memref<1x4x16xf32, #tpu.memory_space<vmem>>, vector<1x4x16xf32>
    tpu.vector_store %arg4[%c0_12, %c0_13, %c0_14], %22 {strides = array<i32>} : memref<1x4x16xf32, #tpu.memory_space<vmem>>, vector<1x4x16xf32>,
    return
  }
  func.func @transform_0(%arg0: i32) -> (i32, i32, i32) {
    %c0_i32 = arith.constant 0 : i32
    %c0_i32_0 = arith.constant 0 : i32
    %c0_i32_1 = arith.constant 0 : i32
    return %arg0, %c0_i32, %c0_i32_0 : i32, i32, i32
  }
  func.func @transform_1(%arg0: i32) -> (i32, i32, i32) {
    %c0_i32 = arith.constant 0 : i32
    %c0_i32_0 = arith.constant 0 : i32
    %c0_i32_1 = arith.constant 0 : i32
    %c0_i32_2 = arith.constant 0 : i32
    return %c0_i32, %c0_i32_0, %c0_i32_1 : i32, i32, i32
  }
  func.func @transform_2(%arg0: i32) -> (i32, i32, i32) {
    %c0_i32 = arith.constant 0 : i32
    %c0_i32_0 = arith.constant 0 : i32
    %c0_i32_1 = arith.constant 0 : i32
    %c0_i32_2 = arith.constant 0 : i32
    return %c0_i32, %c0_i32_0, %c0_i32_1 : i32, i32, i32
  }
  func.func @transform_3(%arg0: i32) -> (i32, i32, i32) {
    %c0_i32 = arith.constant 0 : i32
    %c0_i32_0 = arith.constant 0 : i32
    %c0_i32_1 = arith.constant 0 : i32
    return %arg0, %c0_i32, %c0_i32_0 : i32, i32, i32
  }
}

</mosaic_0001>

<llo_original>
// kernel: tpu_custom_call.1
$region0: #{tpu_custom_call.1}
  #allocation0 [shape = 'u32[]', space=smem, size = 0x4, offset = 0x4, fixed_abs, tag = 'smem constant byte address 0x4 - core index']
  #allocation1 [shape = 'u32[144,128]{1,0:T(1,128)}', space=vmem, size = 0x12000, scoped, tag = 'internal scratch']
  %s0 = inlined_call_operand.vmem [shape: f32[2,4,16], index: 0, kind: input, shape index: {}]
  %s1 = inlined_call_operand.vmem [shape: f32[1,4,1], index: 1, kind: input, shape index: {}]
  %s2 = inlined_call_operand.vmem [shape: f32[1,4,1], index: 2, kind: input, shape index: {}]
  %s3 = inlined_call_operand.hbm [shape: f32[2,4,16], index: 3, kind: output, shape index: {}]
  %s4 = sld [smem:[#allocation0]]
  $region45: #{tpu_custom_call.1} parent=0
    _
  %s6 = ssub.s32 1, %s4
  %s7 = scalar_select 0, %s6, %s4
  $region1: #{tpu_custom_call.1} parent=0
    #allocation2 [shape = 'u8[4096]{0}', space=vmem, size = 0x1000, scoped, tag = 'output window, operand 0']
    #allocation3 [shape = 's32[2]{0}', space=sflag, size = 0x8, scoped, tag = 'scoped memory for tpu_custom_call.1']
    %8 = vsyncpa [#allocation3], 0
    %s9 = scalar_lea.sflag [#allocation3], 1
    %10 = vsyncpa %s9, 0
    loop: start=0, step=1, limit=4
    $region2: #{tpu_custom_call.1} parent=1 // loop_pre_header
      _
    $region3: #{tpu_custom_call.1} parent=1 // loop_header
      %s12 = sphi 0, %s16
      %p13 = scmp.ge.s32.totalorder %s12, 4
      %s22 = sphi 0, %s24
      %s25 = sphi 0, %s22
      %s26 = sphi 0, %s25
      %s42 = sphi 0, %s26
      %s46 = sphi 0, %s46
      %s48 = sphi 0, %s46
      %s49 = sphi 0, %s48
      %s63 = sphi 0, %s49
      %s67 = sphi 0, %s67
      %s69 = sphi 0, %s67
      %s70 = sphi 0, %s69
      %s84 = sphi 0, %s70
      %s90 = sphi 0, %s92
      %s93 = sphi 0, %s90
      %s94 = sphi 0, %s93
      %s110 = sphi 0, %s94
    $region4: #{tpu_custom_call.1} parent=1 // loop_header_branch
      %15 = sbr.rel (%p13) target = $region8
    $region5: #{tpu_custom_call.1} parent=1 // loop_body
      %s17 = ssub.s32 %s12, 1
      %s18 = ssub.s32 %s12, 2
      %s19 = sadd.s32 %s12, 1
      %s20 = ssub.s32 %s12, %s19
      %p21 = scmp.eq.s32.totalorder %s20, 0
      %s23 = sadd.s32 %s22, 1
      %s24 = scalar_select %p21, %s22, %s23
      %p27 = pneg %p21
      %p28 = scmp.eq.s32.totalorder %s12, 1
      %p29 = por %p27, %p28
      %p30 = scmp.ne.s32.totalorder %s22, %s25
      %p31 = scmp.eq.s32.totalorder %s12, 0
      %p32 = por %p30, %p31
      %p33 = scmp.ne.s32.totalorder %s22, %s25
      %p34 = scmp.eq.s32.totalorder %s17, 1
      %p35 = por %p33, %p34
      %p36 = scmp.ne.s32.totalorder %s25, %s26
      %p37 = scmp.eq.s32.totalorder %s17, 0
      %p38 = por %p36, %p37
      %p39 = scmp.ne.s32.totalorder %s25, %s26
      %p40 = scmp.eq.s32.totalorder %s18, 1
      %p41 = por %p39, %p40
      %p43 = scmp.ne.s32.totalorder %s26, %s42
      %p44 = scmp.eq.s32.totalorder %s18, 0
      %p45 = por %p43, %p44
      %s47 = sadd.s32 %s46, 1
      %p50 = scmp.eq.s32.totalorder %s12, 1
      %p51 = scmp.ne.s32.totalorder %s46, %s48
      %p52 = scmp.eq.s32.totalorder %s12, 0
      %p53 = por %p51, %p52
      %p54 = scmp.ne.s32.totalorder %s46, %s48
      %p55 = scmp.eq.s32.totalorder %s17, 1
      %p56 = por %p54, %p55
      %p57 = scmp.ne.s32.totalorder %s48, %s49
      %p58 = scmp.eq.s32.totalorder %s17, 0
      %p59 = por %p57, %p58
      %p60 = scmp.ne.s32.totalorder %s48, %s49
      %p61 = scmp.eq.s32.totalorder %s18, 1
      %p62 = por %p60, %p61
      %p64 = scmp.ne.s32.totalorder %s49, %s63
      %p65 = scmp.eq.s32.totalorder %s18, 0
      %p66 = por %p64, %p65
      %s68 = sadd.s32 %s67, 1
      %p71 = scmp.eq.s32.totalorder %s12, 1
      %p72 = scmp.ne.s32.totalorder %s67, %s69
      %p73 = scmp.eq.s32.totalorder %s12, 0
      %p74 = por %p72, %p73
      %p75 = scmp.ne.s32.totalorder %s67, %s69
      %p76 = scmp.eq.s32.totalorder %s17, 1
      %p77 = por %p75, %p76
      %p78 = scmp.ne.s32.totalorder %s69, %s70
      %p79 = scmp.eq.s32.totalorder %s17, 0
      %p80 = por %p78, %p79
      %p81 = scmp.ne.s32.totalorder %s69, %s70
      %p82 = scmp.eq.s32.totalorder %s18, 1
      %p83 = por %p81, %p82
      %p85 = scmp.ne.s32.totalorder %s70, %s84
      %p86 = scmp.eq.s32.totalorder %s18, 0
      %p87 = por %p85, %p86
      %s88 = ssub.s32 %s12, %s19
      %p89 = scmp.eq.s32.totalorder %s88, 0
      %s91 = sadd.s32 %s90, 1
      %s92 = scalar_select %p89, %s90, %s91
      %p95 = pneg %p89
      %p96 = scmp.eq.s32.totalorder %s12, 1
      %p97 = por %p95, %p96
      %p98 = scmp.ne.s32.totalorder %s90, %s93
      %p99 = scmp.eq.s32.totalorder %s12, 0
      %p100 = por %p98, %p99
      %p101 = scmp.ne.s32.totalorder %s90, %s93
      %p102 = scmp.eq.s32.totalorder %s17, 1
      %p103 = por %p101, %p102
      %p104 = scmp.ne.s32.totalorder %s93, %s94
      %p105 = scmp.eq.s32.totalorder %s17, 0
      %p106 = por %p104, %p105
      %p107 = scmp.ne.s32.totalorder %s93, %s94
      %p108 = scmp.eq.s32.totalorder %s18, 1
      %p109 = por %p107, %p108
      %p111 = scmp.ne.s32.totalorder %s94, %s110
      %p112 = scmp.eq.s32.totalorder %s18, 0
      %p113 = por %p111, %p112
      %p114 = scmp.le.s32.totalorder 1, %s12
      %p115 = scmp.lt.s32.totalorder %s12, 3
      %p116 = pnand %p114, %p115
      %p117 = pneg %p116
      // Predicated region
      $region9: #{tpu_custom_call.1} parent=5 // pred_check
        _
      $region10: #{tpu_custom_call.1} parent=5 // pred_check_branch
        %119 = sbr.rel (%p116) target = $region12
      $region11: #{tpu_custom_call.1} parent=5 // pred_region
        %s120 = ssub.s32 %s12, 1
        // Predicated region
        $region13: #{tpu_custom_call.1} parent=11 // pred_check
          %p121 = pneg %p59
        $region14: #{tpu_custom_call.1} parent=11 // pred_check_branch
          %123 = sbr.rel (%p121) target = $region16
        $region15: #{tpu_custom_call.1} parent=11 // pred_region
          _
        $region16: #{tpu_custom_call.1} parent=11 // pred_fallthru
          _
        // Predicated region
        $region17: #{tpu_custom_call.1} parent=11 // pred_check
          %p124 = pneg %p80
        $region18: #{tpu_custom_call.1} parent=11 // pred_check_branch
          %126 = sbr.rel (%p124) target = $region20
        $region19: #{tpu_custom_call.1} parent=11 // pred_region
          _
        $region20: #{tpu_custom_call.1} parent=11 // pred_fallthru
          _
      $region12: #{tpu_custom_call.1} parent=5 // pred_fallthru
        _
      %p127 = scmp.lt.s32.totalorder %s12, 2
      // Predicated region
      $region21: #{tpu_custom_call.1} parent=5 // pred_check
        %p128 = pneg %p127
      $region22: #{tpu_custom_call.1} parent=5 // pred_check_branch
        %130 = sbr.rel (%p128) target = $region24
      $region23: #{tpu_custom_call.1} parent=5 // pred_region
        // Predicated region
        $region25: #{tpu_custom_call.1} parent=23 // pred_check
          %p131 = pneg %p32
        $region26: #{tpu_custom_call.1} parent=23 // pred_check_branch
          %133 = sbr.rel (%p131) target = $region28
        $region27: #{tpu_custom_call.1} parent=23 // pred_region
          %p134 = scmp.lt.s32.totalorder %s12, 1
          %s135 = scalar_select %p134, %s12, 1
          %s136 = smul.addr %s135, 4
          %s137 = scalar_lea.vmem %s0, %s136
        $region28: #{tpu_custom_call.1} parent=23 // pred_fallthru
          _
      $region24: #{tpu_custom_call.1} parent=5 // pred_fallthru
        _
      %p138 = scmp.le.s32.totalorder 1, %s12
      %p139 = scmp.lt.s32.totalorder %s12, 3
      %p140 = pnand %p138, %p139
      %p141 = pneg %p140
      // Predicated region
      $region29: #{tpu_custom_call.1} parent=5 // pred_check
        _
      $region30: #{tpu_custom_call.1} parent=5 // pred_check_branch
        %143 = sbr.rel (%p140) target = $region32
      $region31: #{tpu_custom_call.1} parent=5 // pred_region
        %s144 = ssub.s32 %s12, 1
        %p145 = scmp.lt.s32.totalorder %s17, 1
        %s146 = scalar_select %p145, %s17, 1
        %s147 = smul.addr %s146, 4
        %s148 = scalar_lea.vmem %s0, %s147
        %p149 = pneg %p38
        %p150 = pneg %p35
        %p151 = pneg %p59
        %p152 = pneg %p56
        %p153 = pneg %p80
        %p154 = pneg %p77
        %p155 = pneg %p106
        %p156 = pneg %p103
        %s157 = sand.u32 %s93, 1
        %s158 = scalar_lea.sflag [#allocation3], %s157
        %s159 = sand.u32 %s93, 1
        %s160 = smul.addr %s159, 4
        %s161 = scalar_lea.vmem [#allocation2], %s160
        %p162 = scmp.lt.s32.totalorder %s17, 1
        %s163 = scalar_select %p162, %s17, 1
        %s164 = smul.addr %s163, 4
        %s165 = scalar_lea.vmem %s0, %s164
        %v166 = vld [vmem:[%s165] sm:$0xf]
        %vm167 = vcmask 125952
        %v168 = vsel %vm167, %v166, 0.0
        %v169 = vrot.slane %v168, 4
        %v170 = vadd.f32 %v168, %v169
        %v171 = vrot.slane %v170, 2
        %v172 = vadd.f32 %v170, %v171
        %v173 = vrot.slane %v172, 1
        %v174 = vadd.f32 %v172, %v173
        %v175 = vmul.f32 %v174, 0.25
        %v176 = vsub.f32 %v166, %v175
        %v177 = vmul.f32 %v176, %v176
        %v178 = vsel %vm167, %v177, 0.0
        %v179 = vrot.slane %v178, 4
        %v180 = vadd.f32 %v178, %v179
        %v181 = vrot.slane %v180, 2
        %v182 = vadd.f32 %v180, %v181
        %v183 = vrot.slane %v182, 1
        %v184 = vadd.f32 %v182, %v183
        %v185 = vmul.f32 %v184, 0.25
        %v186 = vadd.f32 %v185, 1e-05
        %v187 = vrsqrt.pop %v186
        %v188 = vmul.f32 %v176, %v187
        %v189 = vld [vmem:[%s1] sm:$0xf]
        %191 = vset.pattern.permute.xlu0 0
        %192 = vperm.xlu0 %191, %v189
        %v193 = vpop.permute.xlu0 %192
        %v195 = vmul.f32 %v188, %v193
        %v196 = vld [vmem:[%s2] sm:$0xf]
        %198 = vset.pattern.permute.xlu0 0
        %199 = vperm.xlu0 %198, %v196
        %v200 = vpop.permute.xlu0 %199
        %v202 = vadd.f32 %v195, %v200
        %203 = vst.msk [vmem:[%s161] sm:$0xf] %vm167, %v202
        %s204 = sand.u32 %s93, 1
        %s205 = scalar_lea.sflag [#allocation3], %s204
        %s206 = sand.u32 %s93, 1
        %s207 = smul.addr %s206, 4
        %s208 = scalar_lea.vmem [#allocation2], %s207
        // Predicated region
        $region33: #{tpu_custom_call.1} parent=31 // pred_check
          %p209 = pneg %p103
        $region34: #{tpu_custom_call.1} parent=31 // pred_check_branch
          %211 = sbr.rel (%p209) target = $region36
        $region35: #{tpu_custom_call.1} parent=31 // pred_region
          %s213 = ssub.s32 64, 64
          %214 = vsyncadd %s205, %s213
          %s215 = smul.addr %s17, 64
          %s216 = scalar_lea.hbm %s3, %s215
          %s218 = sshll.u32 %s208, 4
          %s219 = int_to_ptr.vmem [resolvable:$true] %s218
          %221 = dma.vmem_to_hbm [thread:$0]  %s219, 64, %s216, %s205
        $region36: #{tpu_custom_call.1} parent=31 // pred_fallthru
          _
      $region32: #{tpu_custom_call.1} parent=5 // pred_fallthru
        _
      %p222 = scmp.le.s32.totalorder 2, %s12
      // Predicated region
      $region37: #{tpu_custom_call.1} parent=5 // pred_check
        %p223 = pneg %p222
      $region38: #{tpu_custom_call.1} parent=5 // pred_check_branch
        %225 = sbr.rel (%p223) target = $region40
      $region39: #{tpu_custom_call.1} parent=5 // pred_region
        %s226 = ssub.s32 %s12, 2
        // Predicated region
        $region41: #{tpu_custom_call.1} parent=39 // pred_check
          %p227 = pneg %p109
        $region42: #{tpu_custom_call.1} parent=39 // pred_check_branch
          %229 = sbr.rel (%p227) target = $region44
        $region43: #{tpu_custom_call.1} parent=39 // pred_region
          %s230 = sand.u32 %s94, 1
          %s231 = scalar_lea.sflag [#allocation3], %s230
          %s232 = sand.u32 %s94, 1
          %s233 = smul.addr %s232, 4
          %s234 = scalar_lea.vmem [#allocation2], %s233
          %235 = dma.done %s231, 64
        $region44: #{tpu_custom_call.1} parent=39 // pred_fallthru
          _
      $region40: #{tpu_custom_call.1} parent=5 // pred_fallthru
        _
    $region6: #{tpu_custom_call.1} parent=1 // loop_footer
      %s16 = sadd.s32 1, %s12
    $region7: #{tpu_custom_call.1} parent=1 // loop_footer_branch
      %11 = sbr.rel target = $region3
    $region8: #{tpu_custom_call.1} parent=1 // loop_exit
      _
    %236 = vsyncpa [#allocation3], 1
    %s237 = scalar_lea.sflag [#allocation3], 1
    %238 = vsyncpa %s237, 1

</llo_original>
